<compile_context>
chip_gen: v5e
topology: v5e:2x2
jax: 0.10.0
libtpu: 0.0.40
codegen_flags: <defaults>
</compile_context>

<pallas_src>
import functools

import jax
import jax.numpy as jnp
from jax.experimental import pallas as pl
from jax.experimental.pallas import tpu as pltpu


INPUT_SIZE = 20
HIDDEN = (128, 128)
OUTPUT_SIZE = 4
OUT_PAD = 8          # output rows padded to a full sublane group (dense store)

_MAX_TB = 2048       # batch-tile cap (per perf review: 1024-2048)
_LANE = 128


def _round_up(n, m):
    return ((n + m - 1) // m) * m


def _choose_tb(batch):
    """Batch tile size.  Batch lives on the lane axis, so tiles are always a
    multiple of 128 lanes; for batch > 128 keep >= 2 grid steps (v7x has two
    TensorCores) while capping the tile to bound VMEM live ranges."""
    b128 = _round_up(batch, _LANE)
    if b128 <= _LANE:
        return _LANE                              # single, fully dense step
    half = _round_up((b128 + 1) // 2, _LANE)      # >= 2 steps
    return min(_MAX_TB, half)


def _policy_kernel(x_ref, w1_ref, b1_ref, w2_ref, b2_ref, w3_ref, b3_ref,
                   out_ref):
    """One batch tile, feature-major.  x_ref: (INPUT_SIZE, tb) bf16."""
    x = x_ref[...]                                                    # (20, tb) bf16

    # Linear(20 -> 128) + ReLU :   h1 = relu(W1 @ x + b1)
    h1 = jnp.dot(w1_ref[...], x, preferred_element_type=jnp.float32)  # (128, tb) f32
    h1 = jnp.maximum(h1 + b1_ref[...], 0.0).astype(jnp.bfloat16)

    # Linear(128 -> 128) + ReLU :  h2 = relu(W2 @ h1 + b2)
    h2 = jnp.dot(w2_ref[...], h1, preferred_element_type=jnp.float32)
    h2 = jnp.maximum(h2 + b2_ref[...], 0.0).astype(jnp.bfloat16)

    # Linear(128 -> 8-padded-4) :  logits = W3p @ h2 + b3p   (rows 4..7 = -1e30)
    logits = jnp.dot(w3_ref[...], h2, preferred_element_type=jnp.float32)
    logits = logits + b3_ref[...]                                     # (8, tb) f32

    # Softmax over the action (sublane) axis.  Padded rows exp to 0, so the
    # store is a fully dense (8, tb) f32 tile and rows 0..3 hold the real probs.
    m = jnp.max(logits, axis=0, keepdims=True)
    e = jnp.exp(logits - m)
    s = jnp.sum(e, axis=0, keepdims=True)
    out_ref[...] = e * pl.reciprocal(s, approx=True)


@functools.partial(jax.jit, static_argnames=("tb",))
def policy_network_forward(x, params, tb=None):
    """x: (B, INPUT_SIZE) float32.  Returns softmax probs (B, OUTPUT_SIZE) f32."""
    w1, b1, w2, b2, w3, b3 = params
    batch = x.shape[0]
    if tb is None:
        tb = _choose_tb(batch)
    b_pad = _round_up(max(batch, tb), tb)
    grid = (b_pad // tb,)

    # Wrapper-side layout in bf16: cast -> pad -> transpose (halves side traffic).
    x_t = jnp.pad(x.astype(jnp.bfloat16), ((0, b_pad - batch), (0, 0))).T  # (20, b_pad)

    w1b = w1.astype(jnp.bfloat16)
    w2b = w2.astype(jnp.bfloat16)
    b1f = b1.astype(jnp.float32)
    b2f = b2.astype(jnp.float32)
    # Pad the output layer to 8 rows: zero weights, -1e30 bias -> softmax = 0.
    w3p = jnp.zeros((OUT_PAD, HIDDEN[1]), jnp.bfloat16)
    w3p = w3p.at[:OUTPUT_SIZE].set(w3.astype(jnp.bfloat16))
    b3p = jnp.full((OUT_PAD, 1), -1e30, jnp.float32)
    b3p = b3p.at[:OUTPUT_SIZE].set(b3.astype(jnp.float32))

    def _rep(shape):
        # Weights/biases replicated across batch tiles; block index never
        # changes so the pipeline skips the re-DMA after the first step.
        return pl.BlockSpec(shape, lambda i: (0, 0))

    flops = 2 * b_pad * (INPUT_SIZE * HIDDEN[0]
                         + HIDDEN[0] * HIDDEN[1]
                         + HIDDEN[1] * OUT_PAD)
    bytes_accessed = (x_t.size * 2 + b_pad * OUT_PAD * 4
                      + (w1b.size + w2b.size + w3p.size) * 2
                      + (b1f.size + b2f.size + b3p.size) * 4)

    out_t = pl.pallas_call(
        _policy_kernel,
        out_shape=jax.ShapeDtypeStruct((OUT_PAD, b_pad), jnp.float32),
        grid_spec=pltpu.PrefetchScalarGridSpec(
            num_scalar_prefetch=0,
            grid=grid,
            in_specs=[
                pl.BlockSpec((INPUT_SIZE, tb), lambda i: (0, i)),   # x^T tile
                _rep((HIDDEN[0], INPUT_SIZE)), _rep((HIDDEN[0], 1)),
                _rep((HIDDEN[1], HIDDEN[0])), _rep((HIDDEN[1], 1)),
                _rep((OUT_PAD, HIDDEN[1])), _rep((OUT_PAD, 1)),
            ],
            out_specs=pl.BlockSpec((OUT_PAD, tb), lambda i: (0, i)),
        ),
        compiler_params=pltpu.CompilerParams(
            dimension_semantics=("parallel",)),
        cost_estimate=pl.CostEstimate(
            flops=flops,
            transcendentals=b_pad * (OUT_PAD + 1),
            bytes_accessed=bytes_accessed),
    )(x_t, w1b, b1f, w2b, b2f, w3p, b3p)

    return out_t[:OUTPUT_SIZE, :batch].T                  # (B, OUTPUT_SIZE)


def _xavier_uniform(key, fan_out, fan_in):
    """torch.nn.init.xavier_uniform_ on a (out, in) weight (PyTorch layout)."""
    limit = (6.0 / (fan_in + fan_out)) ** 0.5
    return jax.random.uniform(key, (fan_out, fan_in), jnp.float32, -limit, limit)


def init_params(key):
    """Parameters in the native PyTorch layout: W (out, in), b (out, 1)."""
    k1, k2, k3 = jax.random.split(key, 3)
    sizes = (INPUT_SIZE,) + HIDDEN + (OUTPUT_SIZE,)
    w1 = _xavier_uniform(k1, sizes[1], sizes[0])
    w2 = _xavier_uniform(k2, sizes[2], sizes[1])
    w3 = _xavier_uniform(k3, sizes[3], sizes[2])
    b1 = jnp.zeros((sizes[1], 1), jnp.float32)
    b2 = jnp.zeros((sizes[2], 1), jnp.float32)
    b3 = jnp.zeros((sizes[3], 1), jnp.float32)
    return (w1, b1, w2, b2, w3, b3)


def _reference_forward(x, params):
    """Plain-JAX f32 reference of the PyTorch forward (sanity check)."""
    w1, b1, w2, b2, w3, b3 = params
    h1 = jnp.maximum(x @ w1.T + b1[:, 0], 0.0)
    h2 = jnp.maximum(h1 @ w2.T + b2[:, 0], 0.0)
    logits = h2 @ w3.T + b3[:, 0]
    return jax.nn.softmax(logits, axis=-1)


# TODO(synk): get_action_and_log_prob (Categorical sampling) is a host-side
# utility on top of forward(); not implemented as a kernel.

if __name__ == "__main__":
    key = jax.random.PRNGKey(0)
    pkey, xkey1, xkey2 = jax.random.split(key, 3)
    params = init_params(pkey)

    # Small batch: padded to 128 lanes, single fully-dense grid step.
    x_small = jax.random.normal(xkey1, (16, INPUT_SIZE), jnp.float32)
    probs_small = jax.block_until_ready(policy_network_forward(x_small, params))
    ref_small = _reference_forward(x_small, params)
    assert probs_small.shape == (16, OUTPUT_SIZE)
    assert jnp.allclose(jnp.sum(probs_small, axis=-1), 1.0, atol=2e-2)
    assert jnp.allclose(probs_small, ref_small, atol=2e-2, rtol=0)  # bf16 matmuls

    # Larger, non-multiple batch: exercises zero-padding + a 2-step "parallel"
    # grid (tb=256) that can shard across both v7x TensorCores.
    x_big = jax.random.normal(xkey2, (384, INPUT_SIZE), jnp.float32)
    probs_big = jax.block_until_ready(policy_network_forward(x_big, params))
    ref_big = _reference_forward(x_big, params)
    assert probs_big.shape == (384, OUTPUT_SIZE)
    assert jnp.allclose(jnp.sum(probs_big, axis=-1), 1.0, atol=2e-2)
    assert jnp.allclose(probs_big, ref_big, atol=2e-2, rtol=0)

    print("KERNEL_OK")
</pallas_src>

<mosaic_0001>
module attributes {stable_mosaic.version = 11 : i64} {
  func.func @_policy_kernel(%arg0: i32, %arg1: memref<20x128xbf16, #tpu.memory_space<vmem>>, %arg2: memref<128x20xbf16, #tpu.memory_space<vmem>>, %arg3: memref<128x1xf32, #tpu.memory_space<vmem>>, %arg4: memref<128x128xbf16, #tpu.memory_space<vmem>>, %arg5: memref<128x1xf32, #tpu.memory_space<vmem>>, %arg6: memref<8x128xbf16, #tpu.memory_space<vmem>>, %arg7: memref<8x1xf32, #tpu.memory_space<vmem>>, %arg8: memref<8x128xf32, #tpu.memory_space<vmem>>) attributes {dimension_semantics = [#tpu.dimension_semantics<parallel>], iteration_bounds = array<i64: 1>, scalar_prefetch = 0 : i64, scratch_operands = 0 : i64, tpu.core_type = #tpu.core_type<tc>, window_params = [{transform_indices = @transform_0, window_bounds = array<i64: 20, 128>}, {pipeline_mode = #tpu.pipeline_mode<synchronous>, transform_indices = @transform_1, window_bounds = array<i64: 128, 20>}, {pipeline_mode = #tpu.pipeline_mode<synchronous>, transform_indices = @transform_2, window_bounds = array<i64: 128, 1>}, {pipeline_mode = #tpu.pipeline_mode<synchronous>, transform_indices = @transform_3, window_bounds = array<i64: 128, 128>}, {pipeline_mode = #tpu.pipeline_mode<synchronous>, transform_indices = @transform_4, window_bounds = array<i64: 128, 1>}, {pipeline_mode = #tpu.pipeline_mode<synchronous>, transform_indices = @transform_5, window_bounds = array<i64: 8, 128>}, {pipeline_mode = #tpu.pipeline_mode<synchronous>, transform_indices = @transform_6, window_bounds = array<i64: 8, 1>}, {transform_indices = @transform_7, window_bounds = array<i64: 8, 128>}]} {
    %c0 = arith.constant 0 : index
    %c0_0 = arith.constant 0 : index
    %0 = vector.load %arg1[%c0, %c0_0] : memref<20x128xbf16, #tpu.memory_space<vmem>>, vector<20x128xbf16>
    %c0_1 = arith.constant 0 : index
    %c0_2 = arith.constant 0 : index
    %1 = vector.load %arg2[%c0_1, %c0_2] : memref<128x20xbf16, #tpu.memory_space<vmem>>, vector<128x20xbf16>
    %cst = arith.constant dense<0.000000e+00> : vector<128x128xf32>
    %2 = tpu.matmul %1, %0, %cst {dimension_numbers = #tpu.dot_dimension_numbers<[1], [0], [0], [1], [0, 0, 1, 1], [], []>} : vector<128x20xbf16>, vector<20x128xbf16>, vector<128x128xf32> -> vector<128x128xf32>
    %c0_3 = arith.constant 0 : index
    %c0_4 = arith.constant 0 : index
    %3 = vector.load %arg3[%c0_3, %c0_4] : memref<128x1xf32, #tpu.memory_space<vmem>>, vector<128x1xf32>
    %4 = vector.broadcast %3 : vector<128x1xf32> to vector<128x128xf32>
    %5 = arith.addf %2, %4 : vector<128x128xf32>
    %cst_5 = arith.constant 0.000000e+00 : f32
    %6 = vector.broadcast %cst_5 : f32 to vector<128x128xf32>
    %7 = arith.maximumf %5, %6 : vector<128x128xf32>
    %8 = arith.truncf %7 : vector<128x128xf32> to vector<128x128xbf16>
    %c0_6 = arith.constant 0 : index
    %c0_7 = arith.constant 0 : index
    %9 = vector.load %arg4[%c0_6, %c0_7] : memref<128x128xbf16, #tpu.memory_space<vmem>>, vector<128x128xbf16>
    %cst_8 = arith.constant dense<0.000000e+00> : vector<128x128xf32>
    %10 = tpu.matmul %9, %8, %cst_8 {dimension_numbers = #tpu.dot_dimension_numbers<[1], [0], [0], [1], [0, 0, 1, 1], [], []>} : vector<128x128xbf16>, vector<128x128xbf16>, vector<128x128xf32> -> vector<128x128xf32>
    %c0_9 = arith.constant 0 : index
    %c0_10 = arith.constant 0 : index
    %11 = vector.load %arg5[%c0_9, %c0_10] : memref<128x1xf32, #tpu.memory_space<vmem>>, vector<128x1xf32>
    %12 = vector.broadcast %11 : vector<128x1xf32> to vector<128x128xf32>
    %13 = arith.addf %10, %12 : vector<128x128xf32>
    %cst_11 = arith.constant 0.000000e+00 : f32
    %14 = vector.broadcast %cst_11 : f32 to vector<128x128xf32>
    %15 = arith.maximumf %13, %14 : vector<128x128xf32>
    %16 = arith.truncf %15 : vector<128x128xf32> to vector<128x128xbf16>
    %c0_12 = arith.constant 0 : index
    %c0_13 = arith.constant 0 : index
    %17 = vector.load %arg6[%c0_12, %c0_13] : memref<8x128xbf16, #tpu.memory_space<vmem>>, vector<8x128xbf16>
    %cst_14 = arith.constant dense<0.000000e+00> : vector<8x128xf32>
    %18 = tpu.matmul %17, %16, %cst_14 {dimension_numbers = #tpu.dot_dimension_numbers<[1], [0], [0], [1], [0, 0, 1, 1], [], []>} : vector<8x128xbf16>, vector<128x128xbf16>, vector<8x128xf32> -> vector<8x128xf32>
    %c0_15 = arith.constant 0 : index
    %c0_16 = arith.constant 0 : index
    %19 = vector.load %arg7[%c0_15, %c0_16] : memref<8x1xf32, #tpu.memory_space<vmem>>, vector<8x1xf32>
    %20 = vector.broadcast %19 : vector<8x1xf32> to vector<8x128xf32>
    %21 = arith.addf %18, %20 : vector<8x128xf32>
    %cst_17 = arith.constant dense<0xFF800000> : vector<128xf32>
    %22 = vector.multi_reduction <maximumf>, %21, %cst_17 [0] : vector<8x128xf32> to vector<128xf32>
    %23 = vector.shape_cast %22 : vector<128xf32> to vector<1x128xf32>
    %24 = vector.broadcast %23 : vector<1x128xf32> to vector<8x128xf32>
    %25 = arith.subf %21, %24 : vector<8x128xf32>
    %26 = math.exp %25 : vector<8x128xf32>
    %cst_18 = arith.constant dense<0.000000e+00> : vector<128xf32>
    %27 = vector.multi_reduction <add>, %26, %cst_18 [0] : vector<8x128xf32> to vector<128xf32>
    %28 = vector.shape_cast %27 : vector<128xf32> to vector<1x128xf32>
    %29 = tpu.reciprocal %28 {approx = true} : vector<1x128xf32> -> vector<1x128xf32>
    %30 = vector.broadcast %29 : vector<1x128xf32> to vector<8x128xf32>
    %31 = arith.mulf %26, %30 : vector<8x128xf32>
    %c0_19 = arith.constant 0 : index
    %c0_20 = arith.constant 0 : index
    %32 = vector.load %arg8[%c0_19, %c0_20] : memref<8x128xf32, #tpu.memory_space<vmem>>, vector<8x128xf32>
    tpu.vector_store %arg8[%c0_19, %c0_20], %31 {strides = array<i32>} : memref<8x128xf32, #tpu.memory_space<vmem>>, vector<8x128xf32>,
    return
  }
  func.func @transform_0(%arg0: i32) -> (i32, i32) {
    %c0_i32 = arith.constant 0 : i32
    %c0_i32_0 = arith.constant 0 : i32
    return %c0_i32, %arg0 : i32, i32
  }
  func.func @transform_1(%arg0: i32) -> (i32, i32) {
    %c0_i32 = arith.constant 0 : i32
    %c0_i32_0 = arith.constant 0 : i32
    %c0_i32_1 = arith.constant 0 : i32
    return %c0_i32, %c0_i32_0 : i32, i32
  }
  func.func @transform_2(%arg0: i32) -> (i32, i32) {
    %c0_i32 = arith.constant 0 : i32
    %c0_i32_0 = arith.constant 0 : i32
    %c0_i32_1 = arith.constant 0 : i32
    return %c0_i32, %c0_i32_0 : i32, i32
  }
  func.func @transform_3(%arg0: i32) -> (i32, i32) {
    %c0_i32 = arith.constant 0 : i32
    %c0_i32_0 = arith.constant 0 : i32
    %c0_i32_1 = arith.constant 0 : i32
    return %c0_i32, %c0_i32_0 : i32, i32
  }
  func.func @transform_4(%arg0: i32) -> (i32, i32) {
    %c0_i32 = arith.constant 0 : i32
    %c0_i32_0 = arith.constant 0 : i32
    %c0_i32_1 = arith.constant 0 : i32
    return %c0_i32, %c0_i32_0 : i32, i32
  }
  func.func @transform_5(%arg0: i32) -> (i32, i32) {
    %c0_i32 = arith.constant 0 : i32
    %c0_i32_0 = arith.constant 0 : i32
    %c0_i32_1 = arith.constant 0 : i32
    return %c0_i32, %c0_i32_0 : i32, i32
  }
  func.func @transform_6(%arg0: i32) -> (i32, i32) {
    %c0_i32 = arith.constant 0 : i32
    %c0_i32_0 = arith.constant 0 : i32
    %c0_i32_1 = arith.constant 0 : i32
    return %c0_i32, %c0_i32_0 : i32, i32
  }
  func.func @transform_7(%arg0: i32) -> (i32, i32) {
    %c0_i32 = arith.constant 0 : i32
    %c0_i32_0 = arith.constant 0 : i32
    return %c0_i32, %arg0 : i32, i32
  }
}

</mosaic_0001>

<llo_original>
// kernel: policy_network_forward.1
$region0: #{policy_network_forward.1}
  #allocation0 [shape = 'u32[]', space=smem, size = 0x4, offset = 0x4, fixed_abs, tag = 'smem constant byte address 0x4 - core index']
  #allocation1 [shape = 'u32[72,128]{1,0:T(1,128)}', space=vmem, size = 0x9000, scoped, tag = 'internal scratch']
  %s0 = inlined_call_operand.vmem [shape: bf16[20,128], index: 0, kind: input, shape index: {}]
  %s1 = inlined_call_operand.vmem [shape: bf16[128,20], index: 1, kind: input, shape index: {}]
  %s2 = inlined_call_operand.vmem [shape: f32[128,1], index: 2, kind: input, shape index: {}]
  %s3 = inlined_call_operand.vmem [shape: bf16[128,128], index: 3, kind: input, shape index: {}]
  %s4 = inlined_call_operand.vmem [shape: f32[128,1], index: 4, kind: input, shape index: {}]
  %s5 = inlined_call_operand.vmem [shape: bf16[8,128], index: 5, kind: input, shape index: {}]
  %s6 = inlined_call_operand.vmem [shape: f32[8,1], index: 6, kind: input, shape index: {}]
  %s7 = inlined_call_operand.vmem [shape: f32[8,128], index: 7, kind: output, shape index: {}]
  %s8 = sld [smem:[#allocation0]]
  $region38: #{policy_network_forward.1} parent=0
    _
  %s10 = ssub.s32 1, %s8
  %s11 = scalar_select 0, %s10, %s8
  // Predicated region
  $region2: #{policy_network_forward.1} parent=0 // pred_check
    _
  $region3: #{policy_network_forward.1} parent=0 // pred_check_branch
    %13 = sbr.rel (0) target = $region5
  $region4: #{policy_network_forward.1} parent=0 // pred_region
    _
  $region5: #{policy_network_forward.1} parent=0 // pred_fallthru
    _
  // Predicated region
  $region6: #{policy_network_forward.1} parent=0 // pred_check
    _
  $region7: #{policy_network_forward.1} parent=0 // pred_check_branch
    %15 = sbr.rel (0) target = $region9
  $region8: #{policy_network_forward.1} parent=0 // pred_region
    _
  $region9: #{policy_network_forward.1} parent=0 // pred_fallthru
    _
  // Predicated region
  $region10: #{policy_network_forward.1} parent=0 // pred_check
    _
  $region11: #{policy_network_forward.1} parent=0 // pred_check_branch
    %17 = sbr.rel (0) target = $region13
  $region12: #{policy_network_forward.1} parent=0 // pred_region
    _
  $region13: #{policy_network_forward.1} parent=0 // pred_fallthru
    _
  // Predicated region
  $region14: #{policy_network_forward.1} parent=0 // pred_check
    _
  $region15: #{policy_network_forward.1} parent=0 // pred_check_branch
    %19 = sbr.rel (0) target = $region17
  $region16: #{policy_network_forward.1} parent=0 // pred_region
    _
  $region17: #{policy_network_forward.1} parent=0 // pred_fallthru
    _
  // Predicated region
  $region18: #{policy_network_forward.1} parent=0 // pred_check
    _
  $region19: #{policy_network_forward.1} parent=0 // pred_check_branch
    %21 = sbr.rel (0) target = $region21
  $region20: #{policy_network_forward.1} parent=0 // pred_region
    _
  $region21: #{policy_network_forward.1} parent=0 // pred_fallthru
    _
  // Predicated region
  $region22: #{policy_network_forward.1} parent=0 // pred_check
    _
  $region23: #{policy_network_forward.1} parent=0 // pred_check_branch
    %23 = sbr.rel (0) target = $region25
  $region24: #{policy_network_forward.1} parent=0 // pred_region
    _
  $region25: #{policy_network_forward.1} parent=0 // pred_fallthru
    _
  // Predicated region
  $region26: #{policy_network_forward.1} parent=0 // pred_check
    _
  $region27: #{policy_network_forward.1} parent=0 // pred_check_branch
    %25 = sbr.rel (0) target = $region29
  $region28: #{policy_network_forward.1} parent=0 // pred_region
    _
  $region29: #{policy_network_forward.1} parent=0 // pred_fallthru
    _
  %v27 = vld [vmem:[%s0] sm:$0xf]
  %v28 = vld [vmem:[%s0 + $0x4] sm:$0xf]
  %v29 = vld [vmem:[%s0 + $0x8] sm:$0x3]
  %v30 = vld [vmem:[%s1] sm:$0xf]
  %v31 = vld [vmem:[%s1 + $0x4] sm:$0xf]
  %v32 = vld [vmem:[%s1 + $0x8] sm:$0xf]
  %v33 = vld [vmem:[%s1 + $0xc] sm:$0xf]
  %v34 = vld [vmem:[%s1 + $0x10] sm:$0xf]
  %v35 = vld [vmem:[%s1 + $0x14] sm:$0xf]
  %v36 = vld [vmem:[%s1 + $0x18] sm:$0xf]
  %v37 = vld [vmem:[%s1 + $0x1c] sm:$0xf]
  %v38 = vld [vmem:[%s1 + $0x20] sm:$0xf]
  %v39 = vld [vmem:[%s1 + $0x24] sm:$0xf]
  %v40 = vld [vmem:[%s1 + $0x28] sm:$0xf]
  %v41 = vld [vmem:[%s1 + $0x2c] sm:$0xf]
  %v42 = vld [vmem:[%s1 + $0x30] sm:$0xf]
  %v43 = vld [vmem:[%s1 + $0x34] sm:$0xf]
  %v44 = vld [vmem:[%s1 + $0x38] sm:$0xf]
  %v45 = vld [vmem:[%s1 + $0x3c] sm:$0xf]
  %v46 = vld [vmem:[%s2] sm:$0xff]
  %v47 = vld [vmem:[%s2 + $0x8] sm:$0xff]
  %v48 = vld [vmem:[%s2 + $0x10] sm:$0xff]
  %v49 = vld [vmem:[%s2 + $0x18] sm:$0xff]
  %v50 = vld [vmem:[%s2 + $0x20] sm:$0xff]
  %v51 = vld [vmem:[%s2 + $0x28] sm:$0xff]
  %v52 = vld [vmem:[%s2 + $0x30] sm:$0xff]
  %v53 = vld [vmem:[%s2 + $0x38] sm:$0xff]
  %v54 = vld [vmem:[%s2 + $0x40] sm:$0xff]
  %v55 = vld [vmem:[%s2 + $0x48] sm:$0xff]
  %v56 = vld [vmem:[%s2 + $0x50] sm:$0xff]
  %v57 = vld [vmem:[%s2 + $0x58] sm:$0xff]
  %v58 = vld [vmem:[%s2 + $0x60] sm:$0xff]
  %v59 = vld [vmem:[%s2 + $0x68] sm:$0xff]
  %v60 = vld [vmem:[%s2 + $0x70] sm:$0xff]
  %v61 = vld [vmem:[%s2 + $0x78] sm:$0xff]
  %63 = vset.pattern.permute.xlu0 0
  %64 = vperm.xlu0 %63, %v46
  %v65 = vpop.permute.xlu0 %64
  %68 = vset.pattern.permute.xlu0 0
  %69 = vperm.xlu0 %68, %v47
  %v70 = vpop.permute.xlu0 %69
  %73 = vset.pattern.permute.xlu0 0
  %74 = vperm.xlu0 %73, %v48
  %v75 = vpop.permute.xlu0 %74
  %78 = vset.pattern.permute.xlu0 0
  %79 = vperm.xlu0 %78, %v49
  %v80 = vpop.permute.xlu0 %79
  %83 = vset.pattern.permute.xlu0 0
  %84 = vperm.xlu0 %83, %v50
  %v85 = vpop.permute.xlu0 %84
  %88 = vset.pattern.permute.xlu0 0
  %89 = vperm.xlu0 %88, %v51
  %v90 = vpop.permute.xlu0 %89
  %93 = vset.pattern.permute.xlu0 0
  %94 = vperm.xlu0 %93, %v52
  %v95 = vpop.permute.xlu0 %94
  %98 = vset.pattern.permute.xlu0 0
  %99 = vperm.xlu0 %98, %v53
  %v100 = vpop.permute.xlu0 %99
  %103 = vset.pattern.permute.xlu0 0
  %104 = vperm.xlu0 %103, %v54
  %v105 = vpop.permute.xlu0 %104
  %108 = vset.pattern.permute.xlu0 0
  %109 = vperm.xlu0 %108, %v55
  %v110 = vpop.permute.xlu0 %109
  %113 = vset.pattern.permute.xlu0 0
  %114 = vperm.xlu0 %113, %v56
  %v115 = vpop.permute.xlu0 %114
  %118 = vset.pattern.permute.xlu0 0
  %119 = vperm.xlu0 %118, %v57
  %v120 = vpop.permute.xlu0 %119
  %123 = vset.pattern.permute.xlu0 0
  %124 = vperm.xlu0 %123, %v58
  %v125 = vpop.permute.xlu0 %124
  %128 = vset.pattern.permute.xlu0 0
  %129 = vperm.xlu0 %128, %v59
  %v130 = vpop.permute.xlu0 %129
  %133 = vset.pattern.permute.xlu0 0
  %134 = vperm.xlu0 %133, %v60
  %v135 = vpop.permute.xlu0 %134
  %138 = vset.pattern.permute.xlu0 0
  %139 = vperm.xlu0 %138, %v61
  %v140 = vpop.permute.xlu0 %139
  %v158 = vunpack.c.l.b16 %v30
  %v159 = vunpack.c.l.b16 %v31
  %v160 = vunpack.c.l.b16 %v32
  %v161 = vunpack.c.l.b16 %v33
  %v162 = vunpack.c.l.b16 %v34
  %v163 = vunpack.c.l.b16 %v35
  %v164 = vunpack.c.l.b16 %v36
  %v165 = vunpack.c.l.b16 %v37
  %v166 = vunpack.c.l.b16 %v38
  %v167 = vunpack.c.l.b16 %v39
  %v168 = vunpack.c.l.b16 %v40
  %v169 = vunpack.c.l.b16 %v41
  %v170 = vunpack.c.l.b16 %v42
  %v171 = vunpack.c.l.b16 %v43
  %v172 = vunpack.c.l.b16 %v44
  %v173 = vunpack.c.l.b16 %v45
  %v174 = vpack.c.b16 %v159, %v158
  %v175 = vpack.c.b16 %v161, %v160
  %v176 = vpack.c.b16 %v163, %v162
  %v177 = vpack.c.b16 %v165, %v164
  %v178 = vpack.c.b16 %v167, %v166
  %v179 = vpack.c.b16 %v169, %v168
  %v180 = vpack.c.b16 %v171, %v170
  %v181 = vpack.c.b16 %v173, %v172
  %v185 = vunpack.c.l.b16 %v27
  %v186 = vunpack.c.l.b16 %v28
  %v187 = vunpack.c.l.b16 %v29
  %v188 = vpack.c.b16 %v186, %v185
  %v189 = vpack.c.b16 %v187, %v187
  %vm191 = vcmask 162816
  %v193 = vsel %vm191, %v174, 0
  %v196 = vsel %vm191, %v175, 0
  %v199 = vsel %vm191, %v176, 0
  %v202 = vsel %vm191, %v177, 0
  %v205 = vsel %vm191, %v178, 0
  %v208 = vsel %vm191, %v179, 0
  %v211 = vsel %vm191, %v180, 0
  %v214 = vsel %vm191, %v181, 0
  %vm216 = vcmask 1041408
  %v218 = vsel %vm216, %v189, 0
  %220 = vmatpush.bf16.msra.mxu0 0
  %221 = vmatpush.bf16.msra.mxu0 0
  %222 = vmatpush.bf16.msra.mxu0 0
  %223 = vmatpush.bf16.msra.mxu0 0
  %224 = vmatpush.bf16.msra.mxu0 0
  %225 = vmatpush.bf16.msra.mxu0 0
  %226 = vmatpush.bf16.msra.mxu0 %v218
  %227 = vmatpush.bf16.msra.mxu0 %v188
  %228 = vmatmul.bf16.gmra.mxu0 %v193
  %v229 = vpop.f32.mrf.mxu0
  %v230 = vadd.f32 %v65, %v229
  %v231 = vpop.f32.mrf.mxu0
  %v232 = vadd.f32 %v70, %v231
  %233 = vmatmul.bf16.gmra.mxu0 %v196
  %v234 = vpop.f32.mrf.mxu0
  %v235 = vadd.f32 %v75, %v234
  %v236 = vpop.f32.mrf.mxu0
  %v237 = vadd.f32 %v80, %v236
  %238 = vmatmul.bf16.gmra.mxu0 %v199
  %v239 = vpop.f32.mrf.mxu0
  %v240 = vadd.f32 %v85, %v239
  %v241 = vpop.f32.mrf.mxu0
  %v242 = vadd.f32 %v90, %v241
  %243 = vmatmul.bf16.gmra.mxu0 %v202
  %v244 = vpop.f32.mrf.mxu0
  %v245 = vadd.f32 %v95, %v244
  %v246 = vpop.f32.mrf.mxu0
  %v247 = vadd.f32 %v100, %v246
  %248 = vmatmul.bf16.gmra.mxu0 %v205
  %v249 = vpop.f32.mrf.mxu0
  %v250 = vadd.f32 %v105, %v249
  %v251 = vpop.f32.mrf.mxu0
  %v252 = vadd.f32 %v110, %v251
  %253 = vmatmul.bf16.gmra.mxu0 %v208
  %v254 = vpop.f32.mrf.mxu0
  %v255 = vadd.f32 %v115, %v254
  %v256 = vpop.f32.mrf.mxu0
  %v257 = vadd.f32 %v120, %v256
  %258 = vmatmul.bf16.gmra.mxu0 %v211
  %v259 = vpop.f32.mrf.mxu0
  %v260 = vadd.f32 %v125, %v259
  %v261 = vpop.f32.mrf.mxu0
  %v262 = vadd.f32 %v130, %v261
  %263 = vmatmul.bf16.gmra.mxu0 %v214
  %v264 = vpop.f32.mrf.mxu0
  %v265 = vadd.f32 %v135, %v264
  %v266 = vpop.f32.mrf.mxu0
  %v267 = vadd.f32 %v140, %v266
  %268 = vdwg.mxu0
  %v269 = vmax.f32 %v230, 0.0
  %v270 = vmax.f32 %v232, 0.0
  %v271 = vmax.f32 %v235, 0.0
  %v272 = vmax.f32 %v237, 0.0
  %v273 = vmax.f32 %v240, 0.0
  %v274 = vmax.f32 %v242, 0.0
  %v275 = vmax.f32 %v245, 0.0
  %v276 = vmax.f32 %v247, 0.0
  %v277 = vmax.f32 %v250, 0.0
  %v278 = vmax.f32 %v252, 0.0
  %v279 = vmax.f32 %v255, 0.0
  %v280 = vmax.f32 %v257, 0.0
  %v281 = vmax.f32 %v260, 0.0
  %v282 = vmax.f32 %v262, 0.0
  %v283 = vmax.f32 %v265, 0.0
  %v284 = vmax.f32 %v267, 0.0
  %v285 = vpack.c.bf16 %v270, %v269
  %v286 = vpack.c.bf16 %v272, %v271
  %v287 = vpack.c.bf16 %v274, %v273
  %v288 = vpack.c.bf16 %v276, %v275
  %v289 = vpack.c.bf16 %v278, %v277
  %v290 = vpack.c.bf16 %v280, %v279
  %v291 = vpack.c.bf16 %v282, %v281
  %v292 = vpack.c.bf16 %v284, %v283
  %v293 = vld [vmem:[%s3] sm:$0xf]
  %v294 = vld [vmem:[%s3 + $0x4] sm:$0xf]
  %v295 = vld [vmem:[%s3 + $0x8] sm:$0xf]
  %v296 = vld [vmem:[%s3 + $0xc] sm:$0xf]
  %v297 = vld [vmem:[%s3 + $0x10] sm:$0xf]
  %v298 = vld [vmem:[%s3 + $0x14] sm:$0xf]
  %v299 = vld [vmem:[%s3 + $0x18] sm:$0xf]
  %v300 = vld [vmem:[%s3 + $0x1c] sm:$0xf]
  %v301 = vld [vmem:[%s3 + $0x20] sm:$0xf]
  %v302 = vld [vmem:[%s3 + $0x24] sm:$0xf]
  %v303 = vld [vmem:[%s3 + $0x28] sm:$0xf]
  %v304 = vld [vmem:[%s3 + $0x2c] sm:$0xf]
  %v305 = vld [vmem:[%s3 + $0x30] sm:$0xf]
  %v306 = vld [vmem:[%s3 + $0x34] sm:$0xf]
  %v307 = vld [vmem:[%s3 + $0x38] sm:$0xf]
  %v308 = vld [vmem:[%s3 + $0x3c] sm:$0xf]
  %v309 = vld [vmem:[%s4] sm:$0xff]
  %v310 = vld [vmem:[%s4 + $0x8] sm:$0xff]
  %v311 = vld [vmem:[%s4 + $0x10] sm:$0xff]
  %v312 = vld [vmem:[%s4 + $0x18] sm:$0xff]
  %v313 = vld [vmem:[%s4 + $0x20] sm:$0xff]
  %v314 = vld [vmem:[%s4 + $0x28] sm:$0xff]
  %v315 = vld [vmem:[%s4 + $0x30] sm:$0xff]
  %v316 = vld [vmem:[%s4 + $0x38] sm:$0xff]
  %v317 = vld [vmem:[%s4 + $0x40] sm:$0xff]
  %v318 = vld [vmem:[%s4 + $0x48] sm:$0xff]
  %v319 = vld [vmem:[%s4 + $0x50] sm:$0xff]
  %v320 = vld [vmem:[%s4 + $0x58] sm:$0xff]
  %v321 = vld [vmem:[%s4 + $0x60] sm:$0xff]
  %v322 = vld [vmem:[%s4 + $0x68] sm:$0xff]
  %v323 = vld [vmem:[%s4 + $0x70] sm:$0xff]
  %v324 = vld [vmem:[%s4 + $0x78] sm:$0xff]
  %326 = vset.pattern.permute.xlu0 0
  %327 = vperm.xlu0 %326, %v309
  %v328 = vpop.permute.xlu0 %327
  %331 = vset.pattern.permute.xlu0 0
  %332 = vperm.xlu0 %331, %v310
  %v333 = vpop.permute.xlu0 %332
  %336 = vset.pattern.permute.xlu0 0
  %337 = vperm.xlu0 %336, %v311
  %v338 = vpop.permute.xlu0 %337
  %341 = vset.pattern.permute.xlu0 0
  %342 = vperm.xlu0 %341, %v312
  %v343 = vpop.permute.xlu0 %342
  %346 = vset.pattern.permute.xlu0 0
  %347 = vperm.xlu0 %346, %v313
  %v348 = vpop.permute.xlu0 %347
  %351 = vset.pattern.permute.xlu0 0
  %352 = vperm.xlu0 %351, %v314
  %v353 = vpop.permute.xlu0 %352
  %356 = vset.pattern.permute.xlu0 0
  %357 = vperm.xlu0 %356, %v315
  %v358 = vpop.permute.xlu0 %357
  %361 = vset.pattern.permute.xlu0 0
  %362 = vperm.xlu0 %361, %v316
  %v363 = vpop.permute.xlu0 %362
  %366 = vset.pattern.permute.xlu0 0
  %367 = vperm.xlu0 %366, %v317
  %v368 = vpop.permute.xlu0 %367
  %371 = vset.pattern.permute.xlu0 0
  %372 = vperm.xlu0 %371, %v318
  %v373 = vpop.permute.xlu0 %372
  %376 = vset.pattern.permute.xlu0 0
  %377 = vperm.xlu0 %376, %v319
  %v378 = vpop.permute.xlu0 %377
  %381 = vset.pattern.permute.xlu0 0
  %382 = vperm.xlu0 %381, %v320
  %v383 = vpop.permute.xlu0 %382
  %386 = vset.pattern.permute.xlu0 0
  %387 = vperm.xlu0 %386, %v321
  %v388 = vpop.permute.xlu0 %387
  %391 = vset.pattern.permute.xlu0 0
  %392 = vperm.xlu0 %391, %v322
  %v393 = vpop.permute.xlu0 %392
  %396 = vset.pattern.permute.xlu0 0
  %397 = vperm.xlu0 %396, %v323
  %v398 = vpop.permute.xlu0 %397
  %401 = vset.pattern.permute.xlu0 0
  %402 = vperm.xlu0 %401, %v324
  %v403 = vpop.permute.xlu0 %402
  %v421 = vunpack.c.l.b16 %v293
  %v422 = vunpack.c.l.b16 %v294
  %v423 = vunpack.c.l.b16 %v295
  %v424 = vunpack.c.l.b16 %v296
  %v425 = vunpack.c.l.b16 %v297
  %v426 = vunpack.c.l.b16 %v298
  %v427 = vunpack.c.l.b16 %v299
  %v428 = vunpack.c.l.b16 %v300
  %v429 = vunpack.c.l.b16 %v301
  %v430 = vunpack.c.l.b16 %v302
  %v431 = vunpack.c.l.b16 %v303
  %v432 = vunpack.c.l.b16 %v304
  %v433 = vunpack.c.l.b16 %v305
  %v434 = vunpack.c.l.b16 %v306
  %v435 = vunpack.c.l.b16 %v307
  %v436 = vunpack.c.l.b16 %v308
  %v437 = vpack.c.b16 %v422, %v421
  %v438 = vpack.c.b16 %v424, %v423
  %v439 = vpack.c.b16 %v426, %v425
  %v440 = vpack.c.b16 %v428, %v427
  %v441 = vpack.c.b16 %v430, %v429
  %v442 = vpack.c.b16 %v432, %v431
  %v443 = vpack.c.b16 %v434, %v433
  %v444 = vpack.c.b16 %v436, %v435
  %453 = vmatpush.bf16.msra.mxu0 %v292
  %454 = vmatpush.bf16.msra.mxu0 %v291
  %455 = vmatpush.bf16.msra.mxu0 %v290
  %456 = vmatpush.bf16.msra.mxu0 %v289
  %457 = vmatpush.bf16.msra.mxu0 %v288
  %458 = vmatpush.bf16.msra.mxu0 %v287
  %459 = vmatpush.bf16.msra.mxu0 %v286
  %460 = vmatpush.bf16.msra.mxu0 %v285
  %461 = vmatmul.bf16.gmra.mxu0 %v437
  %v462 = vpop.f32.mrf.mxu0
  %v463 = vadd.f32 %v328, %v462
  %v464 = vpop.f32.mrf.mxu0
  %v465 = vadd.f32 %v333, %v464
  %466 = vmatmul.bf16.gmra.mxu0 %v438
  %v467 = vpop.f32.mrf.mxu0
  %v468 = vadd.f32 %v338, %v467
  %v469 = vpop.f32.mrf.mxu0
  %v470 = vadd.f32 %v343, %v469
  %471 = vmatmul.bf16.gmra.mxu0 %v439
  %v472 = vpop.f32.mrf.mxu0
  %v473 = vadd.f32 %v348, %v472
  %v474 = vpop.f32.mrf.mxu0
  %v475 = vadd.f32 %v353, %v474
  %476 = vmatmul.bf16.gmra.mxu0 %v440
  %v477 = vpop.f32.mrf.mxu0
  %v478 = vadd.f32 %v358, %v477
  %v479 = vpop.f32.mrf.mxu0
  %v480 = vadd.f32 %v363, %v479
  %481 = vmatmul.bf16.gmra.mxu0 %v441
  %v482 = vpop.f32.mrf.mxu0
  %v483 = vadd.f32 %v368, %v482
  %v484 = vpop.f32.mrf.mxu0
  %v485 = vadd.f32 %v373, %v484
  %486 = vmatmul.bf16.gmra.mxu0 %v442
  %v487 = vpop.f32.mrf.mxu0
  %v488 = vadd.f32 %v378, %v487
  %v489 = vpop.f32.mrf.mxu0
  %v490 = vadd.f32 %v383, %v489
  %491 = vmatmul.bf16.gmra.mxu0 %v443
  %v492 = vpop.f32.mrf.mxu0
  %v493 = vadd.f32 %v388, %v492
  %v494 = vpop.f32.mrf.mxu0
  %v495 = vadd.f32 %v393, %v494
  %496 = vmatmul.bf16.gmra.mxu0 %v444
  %v497 = vpop.f32.mrf.mxu0
  %v498 = vadd.f32 %v398, %v497
  %v499 = vpop.f32.mrf.mxu0
  %v500 = vadd.f32 %v403, %v499
  %501 = vdwg.mxu0
  %v502 = vmax.f32 %v463, 0.0
  %v503 = vmax.f32 %v465, 0.0
  %v504 = vmax.f32 %v468, 0.0
  %v505 = vmax.f32 %v470, 0.0
  %v506 = vmax.f32 %v473, 0.0
  %v507 = vmax.f32 %v475, 0.0
  %v508 = vmax.f32 %v478, 0.0
  %v509 = vmax.f32 %v480, 0.0
  %v510 = vmax.f32 %v483, 0.0
  %v511 = vmax.f32 %v485, 0.0
  %v512 = vmax.f32 %v488, 0.0
  %v513 = vmax.f32 %v490, 0.0
  %v514 = vmax.f32 %v493, 0.0
  %v515 = vmax.f32 %v495, 0.0
  %v516 = vmax.f32 %v498, 0.0
  %v517 = vmax.f32 %v500, 0.0
  %v518 = vpack.c.bf16 %v503, %v502
  %v519 = vpack.c.bf16 %v505, %v504
  %v520 = vpack.c.bf16 %v507, %v506
  %v521 = vpack.c.bf16 %v509, %v508
  %v522 = vpack.c.bf16 %v511, %v510
  %v523 = vpack.c.bf16 %v513, %v512
  %v524 = vpack.c.bf16 %v515, %v514
  %v525 = vpack.c.bf16 %v517, %v516
  %v526 = vld [vmem:[%s5] sm:$0xf]
  %v527 = vld [vmem:[%s6] sm:$0xff]
  %529 = vset.pattern.permute.xlu0 0
  %530 = vperm.xlu0 %529, %v527
  %v531 = vpop.permute.xlu0 %530
  %533 = vmatpush.bf16.msra.mxu0 %v525
  %534 = vmatpush.bf16.msra.mxu0 %v524
  %535 = vmatpush.bf16.msra.mxu0 %v523
  %536 = vmatpush.bf16.msra.mxu0 %v522
  %537 = vmatpush.bf16.msra.mxu0 %v521
  %538 = vmatpush.bf16.msra.mxu0 %v520
  %539 = vmatpush.bf16.msra.mxu0 %v519
  %540 = vmatpush.bf16.msra.mxu0 %v518
  %541 = vmatmul.bf16.gmra.mxu0 %v526
  %v542 = vpop.f32.mrf.mxu0
  %v543 = vadd.f32 %v531, %v542
  %v544 = vpop.f32.mrf.mxu0
  %545 = vdwg.mxu0
  %v546 = vrot.slane %v543, 4
  %v547 = vmax.f32 %v543, %v546
  %v548 = vrot.slane %v547, 2
  %v549 = vmax.f32 %v547, %v548
  %v550 = vrot.slane %v549, 1
  %v551 = vmax.f32 %v549, %v550
  %v552 = vsub.f32 %v543, %v551
  %v553 = vmul.f32 %v552, 1.442695
  %v554 = vpow.pop %v553
  %v555 = vrot.slane %v554, 4
  %v556 = vadd.f32 %v554, %v555
  %v557 = vrot.slane %v556, 2
  %v558 = vadd.f32 %v556, %v557
  %v559 = vrot.slane %v558, 1
  %v560 = vadd.f32 %v558, %v559
  %v561 = vrcp.pop %v560
  %v562 = vmul.f32 %v554, %v561
  %563 = vst [vmem:[%s7] sm:$0xff] %v562
  // Predicated region
  $region30: #{policy_network_forward.1} parent=0 // pred_check
    _
  $region31: #{policy_network_forward.1} parent=0 // pred_check_branch
    %565 = sbr.rel (0) target = $region33
  $region32: #{policy_network_forward.1} parent=0 // pred_region
    _
  $region33: #{policy_network_forward.1} parent=0 // pred_fallthru
    _
  // Predicated region
  $region34: #{policy_network_forward.1} parent=0 // pred_check
    _
  $region35: #{policy_network_forward.1} parent=0 // pred_check_branch
    %567 = sbr.rel (0) target = $region37
  $region36: #{policy_network_forward.1} parent=0 // pred_region
    _
  $region37: #{policy_network_forward.1} parent=0 // pred_fallthru
    _

</llo_original>
